<compile_context>
chip_gen: v5e
topology: v5e:2x2
jax: 0.10.0
libtpu: 0.0.40
codegen_flags: <defaults>
</compile_context>

<pallas_src>
from functools import lru_cache

import jax
import jax.numpy as jnp
from jax.experimental import pallas as pl
from jax.experimental.pallas import tpu as pltpu

_LANE = 128
_SUBLANE = 8
_FAST_PATH_MACS = 1 << 20  # below this, a fused XLA dot beats kernel launch cost


def _round_up(x, m):
    return ((x + m - 1) // m) * m


def _cdiv(a, b):
    return -(-a // b)


@lru_cache(maxsize=None)
def _gen_params():
    """Generation-aware (tile_budget_bytes, vmem_limit_bytes, multi_tc)."""
    vmem_phys = None
    try:
        vmem_phys = int(pltpu.get_tpu_info().vmem_capacity_bytes)
    except Exception:
        pass
    kind = ""
    try:
        kind = jax.devices()[0].device_kind.lower()
    except Exception:
        pass
    if vmem_phys is None:
        vmem_phys = 64 * 1024 * 1024  # conservative: assume the smallest VMEM (v7x)

    # Multi-TensorCore parts (grid axes shard across cores): v4 / v5p / v7x.
    multi_tc = any(t in kind for t in ("v4", "v5p", "v7")) or vmem_phys <= 64 * 1024 * 1024

    if vmem_phys >= 96 * 1024 * 1024:      # v5e / v6e: 128 MiB physical VMEM
        budget = 72 * 1024 * 1024
        limit = 100 * 1024 * 1024
    else:                                  # v7x: 64 MiB physical VMEM per TC
        budget = 30 * 1024 * 1024
        limit = 48 * 1024 * 1024
    return budget, limit, multi_tc


# --------------------------------------------------------------------------- #
# Kernels
# --------------------------------------------------------------------------- #
def _lda2fc_kernel_noacc(x_ref, wt_ref, b_ref, o_ref):
    """Single K step: whole reduction axis resident; no accumulator scratch."""
    w = wt_ref[...]
    acc = jnp.dot(x_ref[...].astype(w.dtype), w, preferred_element_type=jnp.float32)
    o_ref[...] = (acc + b_ref[...]).astype(o_ref.dtype)


def _lda2fc_kernel_acc(x_ref, wt_ref, b_ref, o_ref, acc_ref):
    """Streamed K: f32 accumulator resident across the trailing grid axis."""
    k_idx = pl.program_id(2)
    w = wt_ref[...]
    partial = jnp.dot(x_ref[...].astype(w.dtype), w, preferred_element_type=jnp.float32)

    @pl.when(k_idx == 0)
    def _init():
        acc_ref[...] = partial          # direct assign: no zero-fill pass

    @pl.when(k_idx > 0)
    def _accum():
        acc_ref[...] += partial

    @pl.when(k_idx == pl.num_programs(2) - 1)
    def _finalize():
        o_ref[...] = (acc_ref[...] + b_ref[...]).astype(o_ref.dtype)


# --------------------------------------------------------------------------- #
# Parameter prep (hoisted out of the forward path)
# --------------------------------------------------------------------------- #
def _choose_param_tiles(k, o_pad, dtype_bytes):
    budget, _, multi_tc = _gen_params()

    # Output (lane) tile: the whole padded output axis when modest, otherwise
    # the largest 128-multiple that divides it.
    if o_pad <= 1024:
        tile_o = o_pad
    else:
        tile_o = next(t for t in (1024, 512, 256, 128) if o_pad % t == 0)

    # Budget for the double-buffered W.T block.  On v7x, row-tile size gets
    # priority over weight residency (streaming K costs no extra HBM traffic:
    # the f32 accumulator stays VMEM-resident across the K axis).
    weight_budget = (budget // 4) if multi_tc else (budget // 2)
    if 2 * k * tile_o * dtype_bytes <= weight_budget:
        tile_k = k                                  # whole reduction axis resident
    else:
        # Deep K slices amortize accumulator traffic (esp. v5e: 1 vst slot).
        tile_k = 512 if multi_tc else 2048
        while tile_k > 512 and 2 * tile_k * tile_o * dtype_bytes > weight_budget:
            tile_k //= 2
    return tile_o, tile_k


def lda2fc_prepare(weight, bias, *, compute_dtype=None):
    """One-time parameter prep (equivalent of __init__ / set_weight).

    weight: (outputDim, inputDim); bias: (outputDim, 1).
    Optionally store the weight in `compute_dtype` (e.g. jnp.bfloat16) for
    MXU-bound shapes; accumulation stays f32.
    """
    output_dim, input_dim = weight.shape
    w_dtype = jnp.dtype(compute_dtype) if compute_dtype is not None else weight.dtype
    dtype_bytes = w_dtype.itemsize

    # Lane-pad the output axis so kernel stores are lane-dense; use 256
    # granularity past one MXU width (v6e/v7x MXUs are 256 wide).
    lane_mult = _LANE if output_dim <= _LANE else 256
    o_pad = _round_up(max(output_dim, _LANE), lane_mult)

    tile_o, tile_k = _choose_param_tiles(input_dim, o_pad, dtype_bytes)

    # K is zero-padded ONCE here (only matters when the weight is streamed),
    # so the forward path never pads / rewrites W.T in HBM.
    k_pad = _round_up(input_dim, tile_k)

    w_t = jnp.zeros((k_pad, o_pad), w_dtype)
    w_t = w_t.at[:input_dim, :output_dim].set(weight.T.astype(w_dtype))
    b_row = jnp.zeros((1, o_pad), jnp.float32)
    b_row = b_row.at[:, :output_dim].set(bias.reshape(1, output_dim).astype(jnp.float32))

    return dict(w_t=w_t, b_row=b_row, output_dim=output_dim,
                input_dim=input_dim, tile_o=tile_o, tile_k=tile_k)


# --------------------------------------------------------------------------- #
# Forward
# --------------------------------------------------------------------------- #
def lda2fc_forward(x, params, *, allow_xla_fast_path=True):
    """x: (N, inputDim); params from lda2fc_prepare. Returns (N, outputDim)."""
    w_t, b_row = params["w_t"], params["b_row"]
    output_dim, k = params["output_dim"], params["input_dim"]
    tile_o, tile_k = params["tile_o"], params["tile_k"]

    assert x.ndim == 2, "LDA2FC expects a 2-D input (N, inputDim)"
    n, k_x = x.shape
    assert k_x == k, "input feature dim mismatch between x and prepared weight"
    k_pad, o_pad = w_t.shape

    # Tiny-shape fast path: the work is a single vmatmul; wall-clock would be
    # dominated by dispatch + per-grid-step overhead in the Pallas path.
    if allow_xla_fast_path and n * k * o_pad <= _FAST_PATH_MACS:
        acc = jnp.dot(x, w_t[:k, :output_dim].astype(x.dtype),
                      preferred_element_type=jnp.float32,
                      precision=jax.lax.Precision.HIGHEST)
        return (acc + b_row[:, :output_dim]).astype(x.dtype)

    budget, vmem_limit, multi_tc = _gen_params()
    x_bytes = jnp.dtype(x.dtype).itemsize
    w_bytes = jnp.dtype(w_t.dtype).itemsize
    sub = max(_SUBLANE, 32 // x_bytes)           # 8 f32 / 16 bf16 / 32 int8

    n_k_tiles = k_pad // tile_k
    n_out_tiles = o_pad // tile_o

    # VMEM-budgeted row tile (the pipeline double-buffers each operand block).
    fixed = 2 * tile_k * tile_o * w_bytes + 2 * tile_o * 4      # W.T + bias blocks
    per_row = 2 * tile_k * x_bytes + 2 * tile_o * x_bytes       # x + out blocks
    if n_k_tiles > 1:
        per_row += tile_o * 4                                   # f32 accumulator
    avail = max(budget - fixed, per_row * sub)
    tile_n = max(sub, (avail // per_row) // sub * sub)
    tile_n = min(tile_n, 1024)

    # Pad N only to the sublane multiple (never to tile_n); the last row tile
    # may be partial — Pallas masks its out-of-range stores.
    n_pad = _round_up(n, sub)
    tile_n = min(tile_n, n_pad)
    # Keep >= 2 row tiles only on multi-TensorCore parts (v7x megacore);
    # halving tile_n on single-TC v5e/v6e would just double per-step overhead.
    if multi_tc and n_pad >= 2 * sub:
        tile_n = min(tile_n, _round_up(_cdiv(n_pad, 2), sub))

    x_p = x
    if n_pad != n or k_pad != k:
        # K padding only triggers for a streamed, ragged K (the weight itself
        # was padded once in lda2fc_prepare); N padding is at most `sub-1` rows.
        x_p = jnp.pad(x, ((0, n_pad - n), (0, k_pad - k)))

    grid_n = _cdiv(n_pad, tile_n)

    if n_k_tiles == 1:
        out_pad = pl.pallas_call(
            _lda2fc_kernel_noacc,
            out_shape=jax.ShapeDtypeStruct((n_pad, o_pad), x.dtype),
            grid=(grid_n, n_out_tiles),
            in_specs=[
                pl.BlockSpec((tile_n, tile_k), lambda i, j: (i, 0)),
                pl.BlockSpec((tile_k, tile_o), lambda i, j: (0, j)),
                pl.BlockSpec((1, tile_o), lambda i, j: (0, j)),
            ],
            out_specs=pl.BlockSpec((tile_n, tile_o), lambda i, j: (i, j)),
            compiler_params=pltpu.CompilerParams(
                dimension_semantics=("parallel", "parallel"),
                vmem_limit_bytes=vmem_limit,
            ),
        )(x_p, w_t, b_row)
    else:
        out_pad = pl.pallas_call(
            _lda2fc_kernel_acc,
            out_shape=jax.ShapeDtypeStruct((n_pad, o_pad), x.dtype),
            grid=(grid_n, n_out_tiles, n_k_tiles),
            in_specs=[
                pl.BlockSpec((tile_n, tile_k), lambda i, j, kk: (i, kk)),
                pl.BlockSpec((tile_k, tile_o), lambda i, j, kk: (kk, j)),
                pl.BlockSpec((1, tile_o), lambda i, j, kk: (0, j)),
            ],
            out_specs=pl.BlockSpec((tile_n, tile_o), lambda i, j, kk: (i, j)),
            scratch_shapes=[pltpu.VMEM((tile_n, tile_o), jnp.float32)],
            compiler_params=pltpu.CompilerParams(
                dimension_semantics=("parallel", "parallel", "arbitrary"),
                vmem_limit_bytes=vmem_limit,
            ),
        )(x_p, w_t, b_row)

    return out_pad[:n, :output_dim]


# --------------------------------------------------------------------------- #
# Demo / correctness check
# --------------------------------------------------------------------------- #
if __name__ == "__main__":
    key = jax.random.PRNGKey(0)
    kx, kw, kb, kx2, kw2, kb2 = jax.random.split(key, 6)

    # --- Test 1: the module's own tiny shapes; force the Pallas kernel path. ---
    N, input_dim, output_dim = 8, 32, 16
    x = jax.random.normal(kx, (N, input_dim), dtype=jnp.float32)
    weight = jax.random.normal(kw, (output_dim, input_dim), dtype=jnp.float32)
    bias = jax.random.normal(kb, (output_dim, 1), dtype=jnp.float32)

    params = lda2fc_prepare(weight, bias)
    out = jax.block_until_ready(lda2fc_forward(x, params, allow_xla_fast_path=False))
    ref = (jnp.matmul(weight, x.T, precision=jax.lax.Precision.HIGHEST) + bias).T
    assert out.shape == (N, output_dim)
    assert jnp.allclose(out, ref, atol=5e-4, rtol=1e-4)

    # Default path (tiny shapes take the fused-XLA fast path) must match too.
    out_fast = jax.block_until_ready(lda2fc_forward(x, params))
    assert jnp.allclose(out_fast, ref, atol=5e-4, rtol=1e-4)

    # --- Test 2: ragged N and non-multiple-of-128 output dim (still small). ---
    N2, input_dim2, output_dim2 = 300, 96, 20
    x2 = jax.random.normal(kx2, (N2, input_dim2), dtype=jnp.float32)
    weight2 = jax.random.normal(kw2, (output_dim2, input_dim2), dtype=jnp.float32)
    bias2 = jax.random.normal(kb2, (output_dim2, 1), dtype=jnp.float32)

    params2 = lda2fc_prepare(weight2, bias2)
    out2 = jax.block_until_ready(lda2fc_forward(x2, params2, allow_xla_fast_path=False))
    ref2 = (jnp.matmul(weight2, x2.T, precision=jax.lax.Precision.HIGHEST) + bias2).T
    assert out2.shape == (N2, output_dim2)
    assert jnp.allclose(out2, ref2, atol=5e-4, rtol=1e-4)

    print("KERNEL_OK")
</pallas_src>

<mosaic_0001>
module attributes {stable_mosaic.version = 11 : i64} {
  func.func @_lda2fc_kernel_noacc(%arg0: i32, %arg1: i32, %arg2: memref<8x32xf32, #tpu.memory_space<vmem>>, %arg3: memref<32x128xf32, #tpu.memory_space<vmem>>, %arg4: memref<1x128xf32, #tpu.memory_space<vmem>>, %arg5: memref<8x128xf32, #tpu.memory_space<vmem>>) attributes {dimension_semantics = [#tpu.dimension_semantics<parallel>, #tpu.dimension_semantics<parallel>], iteration_bounds = array<i64: 1, 1>, scalar_prefetch = 0 : i64, scratch_operands = 0 : i64, tpu.core_type = #tpu.core_type<tc>, window_params = [{transform_indices = @transform_0, window_bounds = array<i64: 8, 32>}, {transform_indices = @transform_1, window_bounds = array<i64: 32, 128>}, {transform_indices = @transform_2, window_bounds = array<i64: 1, 128>}, {transform_indices = @transform_3, window_bounds = array<i64: 8, 128>}]} {
    %c0 = arith.constant 0 : index
    %c0_0 = arith.constant 0 : index
    %0 = vector.load %arg3[%c0, %c0_0] : memref<32x128xf32, #tpu.memory_space<vmem>>, vector<32x128xf32>
    %c0_1 = arith.constant 0 : index
    %c0_2 = arith.constant 0 : index
    %1 = vector.load %arg2[%c0_1, %c0_2] : memref<8x32xf32, #tpu.memory_space<vmem>>, vector<8x32xf32>
    %cst = arith.constant dense<0.000000e+00> : vector<8x128xf32>
    %2 = tpu.matmul %1, %0, %cst {dimension_numbers = #tpu.dot_dimension_numbers<[1], [0], [0], [1], [0, 0, 1, 1], [], []>} : vector<8x32xf32>, vector<32x128xf32>, vector<8x128xf32> -> vector<8x128xf32>
    %c0_3 = arith.constant 0 : index
    %c0_4 = arith.constant 0 : index
    %3 = vector.load %arg4[%c0_3, %c0_4] : memref<1x128xf32, #tpu.memory_space<vmem>>, vector<1x128xf32>
    %4 = vector.broadcast %3 : vector<1x128xf32> to vector<8x128xf32>
    %5 = arith.addf %2, %4 : vector<8x128xf32>
    %c0_5 = arith.constant 0 : index
    %c0_6 = arith.constant 0 : index
    %6 = vector.load %arg5[%c0_5, %c0_6] : memref<8x128xf32, #tpu.memory_space<vmem>>, vector<8x128xf32>
    tpu.vector_store %arg5[%c0_5, %c0_6], %5 {strides = array<i32>} : memref<8x128xf32, #tpu.memory_space<vmem>>, vector<8x128xf32>,
    return
  }
  func.func @transform_0(%arg0: i32, %arg1: i32) -> (i32, i32) {
    %c0_i32 = arith.constant 0 : i32
    %c0_i32_0 = arith.constant 0 : i32
    return %arg0, %c0_i32 : i32, i32
  }
  func.func @transform_1(%arg0: i32, %arg1: i32) -> (i32, i32) {
    %c0_i32 = arith.constant 0 : i32
    %c0_i32_0 = arith.constant 0 : i32
    return %c0_i32, %arg1 : i32, i32
  }
  func.func @transform_2(%arg0: i32, %arg1: i32) -> (i32, i32) {
    %c0_i32 = arith.constant 0 : i32
    %c0_i32_0 = arith.constant 0 : i32
    return %c0_i32, %arg1 : i32, i32
  }
  func.func @transform_3(%arg0: i32, %arg1: i32) -> (i32, i32) {
    %c0_i32 = arith.constant 0 : i32
    return %arg0, %arg1 : i32, i32
  }
}

</mosaic_0001>

<llo_original>
// kernel: tpu_custom_call.1
$region0: #{tpu_custom_call.1}
  #allocation0 [shape = 'u32[]', space=smem, size = 0x4, offset = 0x4, fixed_abs, tag = 'smem constant byte address 0x4 - core index']
  #allocation1 [shape = 'u32[72,128]{1,0:T(1,128)}', space=vmem, size = 0x9000, scoped, tag = 'internal scratch']
  %s0 = inlined_call_operand.hbm [shape: f32[8,32], index: 0, kind: input, shape index: {}]
  %s1 = inlined_call_operand.hbm [shape: f32[32,128], index: 1, kind: input, shape index: {}]
  %s2 = inlined_call_operand.vmem [shape: f32[1,128], index: 2, kind: input, shape index: {}]
  %s3 = inlined_call_operand.hbm [shape: f32[8,128], index: 3, kind: output, shape index: {}]
  %s4 = sld [smem:[#allocation0]]
  $region30: #{tpu_custom_call.1} parent=0
    _
  %s6 = ssub.s32 1, %s4
  %s7 = scalar_select 0, %s6, %s4
  $region1: #{tpu_custom_call.1} parent=0
    #allocation2 [shape = 'u8[4096]{0}', space=vmem, size = 0x1000, scoped, tag = 'input window, operand 0, single buffered']
    #allocation3 [shape = 's32[1]{0}', space=sflag, size = 0x4, scoped, tag = 'scoped memory for tpu_custom_call.1']
    #allocation4 [shape = 's32[1]{0}', space=sflag, size = 0x4, scoped, tag = 'scoped memory for tpu_custom_call.1']
    #allocation5 [shape = 'u8[16384]{0}', space=vmem, size = 0x4000, scoped, tag = 'input window, operand 1, single buffered']
    #allocation6 [shape = 's32[1]{0}', space=sflag, size = 0x4, scoped, tag = 'scoped memory for tpu_custom_call.1']
    #allocation7 [shape = 'u8[4096]{0}', space=vmem, size = 0x1000, scoped, tag = 'output window, operand 0, single buffered']
    %8 = vsyncpa [#allocation3], 0
    %9 = vsyncpa [#allocation6], 0
    %10 = vsyncpa [#allocation4], 0
    // Predicated region
    $region2: #{tpu_custom_call.1} parent=1 // pred_check
      _
    $region3: #{tpu_custom_call.1} parent=1 // pred_check_branch
      %12 = sbr.rel (0) target = $region5
    $region4: #{tpu_custom_call.1} parent=1 // pred_region
      %14 = vsyncadd [#allocation3], 0
      %s16 = sshll.u32 %s0, 4
      %s17 = int_to_ptr.hbm [resolvable:$true] %s16
      %s18 = sshll.u32 [#allocation2], 4
      %s19 = int_to_ptr.vmem [resolvable:$true] %s18
      %21 = dma.hbm_to_vmem [thread:$0]  %s17, 128, %s19, [#allocation3]
    $region5: #{tpu_custom_call.1} parent=1 // pred_fallthru
      _
    // Predicated region
    $region6: #{tpu_custom_call.1} parent=1 // pred_check
      _
    $region7: #{tpu_custom_call.1} parent=1 // pred_check_branch
      %23 = sbr.rel (0) target = $region9
    $region8: #{tpu_custom_call.1} parent=1 // pred_region
      %25 = vsyncadd [#allocation6], 0
      %s26 = sshll.u32 %s1, 4
      %s27 = int_to_ptr.hbm [resolvable:$true] %s26
      %s28 = sshll.u32 [#allocation5], 4
      %s29 = int_to_ptr.vmem [resolvable:$true] %s28
      %34 = dma.hbm_to_vmem [thread:$0]  %s27, 512, %s29, [#allocation6], 128, 128, 8
    $region9: #{tpu_custom_call.1} parent=1 // pred_fallthru
      _
    // Predicated region
    $region10: #{tpu_custom_call.1} parent=1 // pred_check
      _
    $region11: #{tpu_custom_call.1} parent=1 // pred_check_branch
      %36 = sbr.rel (0) target = $region13
    $region12: #{tpu_custom_call.1} parent=1 // pred_region
      _
    $region13: #{tpu_custom_call.1} parent=1 // pred_fallthru
      _
    // Predicated region
    $region14: #{tpu_custom_call.1} parent=1 // pred_check
      _
    $region15: #{tpu_custom_call.1} parent=1 // pred_check_branch
      %38 = sbr.rel (0) target = $region17
    $region16: #{tpu_custom_call.1} parent=1 // pred_region
      %40 = dma.done [#allocation3], 128
    $region17: #{tpu_custom_call.1} parent=1 // pred_fallthru
      _
    // Predicated region
    $region18: #{tpu_custom_call.1} parent=1 // pred_check
      _
    $region19: #{tpu_custom_call.1} parent=1 // pred_check_branch
      %42 = sbr.rel (0) target = $region21
    $region20: #{tpu_custom_call.1} parent=1 // pred_region
      %44 = dma.done [#allocation6], 512
    $region21: #{tpu_custom_call.1} parent=1 // pred_fallthru
      _
    %v45 = vld [vmem:[#allocation5] sm:$0xff]
    %v46 = vld [vmem:[#allocation5 + $0x8] sm:$0xff]
    %v47 = vld [vmem:[#allocation5 + $0x10] sm:$0xff]
    %v48 = vld [vmem:[#allocation5 + $0x18] sm:$0xff]
    %v49 = vld [vmem:[#allocation2] sm:$0xff]
    %v50 = vld [vmem:[%s2] sm:$0x1]
    %v52 = vperm.slane %v50, 0
    %vm54 = vcmask 261120
    %v56 = vsel %vm54, %v49, 0
    %58 = vmatpush.msra.mxu0 0.0
    %59 = vmatpush.msra.mxu0 0.0
    %60 = vmatpush.msra.mxu0 0.0
    %61 = vmatpush.msra.mxu0 0.0
    %62 = vmatpush.msra.mxu0 0.0
    %63 = vmatpush.msra.mxu0 0.0
    %64 = vmatpush.msra.mxu0 0.0
    %65 = vmatpush.msra.mxu0 0.0
    %66 = vmatpush.msra.mxu0 0.0
    %67 = vmatpush.msra.mxu0 0.0
    %68 = vmatpush.msra.mxu0 0.0
    %69 = vmatpush.msra.mxu0 0.0
    %70 = vmatpush.msra.mxu0 %v48
    %71 = vmatpush.msra.mxu0 %v47
    %72 = vmatpush.msra.mxu0 %v46
    %73 = vmatpush.msra.mxu0 %v45
    %74 = vmatmul.f32.gmra.mxu0 %v56
    %v75 = vpop.f32.mrf.mxu0
    %v76 = vadd.f32 %v52, %v75
    %77 = vdwg.mxu0
    %78 = vst [vmem:[#allocation7] sm:$0xff] %v76
    // Predicated region
    $region22: #{tpu_custom_call.1} parent=1 // pred_check
      _
    $region23: #{tpu_custom_call.1} parent=1 // pred_check_branch
      %80 = sbr.rel (0) target = $region25
    $region24: #{tpu_custom_call.1} parent=1 // pred_region
      %82 = vsyncadd [#allocation4], 0
      %s84 = sshll.u32 [#allocation7], 4
      %s85 = int_to_ptr.vmem [resolvable:$true] %s84
      %s86 = sshll.u32 %s3, 4
      %s87 = int_to_ptr.hbm [resolvable:$true] %s86
      %89 = dma.vmem_to_hbm [thread:$0]  %s85, 128, %s87, [#allocation4]
    $region25: #{tpu_custom_call.1} parent=1 // pred_fallthru
      _
    // Predicated region
    $region26: #{tpu_custom_call.1} parent=1 // pred_check
      _
    $region27: #{tpu_custom_call.1} parent=1 // pred_check_branch
      %91 = sbr.rel (0) target = $region29
    $region28: #{tpu_custom_call.1} parent=1 // pred_region
      %93 = dma.done [#allocation4], 128
    $region29: #{tpu_custom_call.1} parent=1 // pred_fallthru
      _
    %94 = vsyncpa [#allocation3], 1
    %95 = vsyncpa [#allocation6], 1
    %96 = vsyncpa [#allocation4], 1

</llo_original>
